<compile_context>
chip_gen: v7x
topology: tpu7x:2x2x1
jax: 0.10.0
libtpu: 0.0.40
codegen_flags: <defaults>
</compile_context>

<pallas_src>
import functools

import jax
import jax.numpy as jnp
from jax import lax
from jax.experimental import pallas as pl
from jax.experimental.pallas import tpu as pltpu


# ----------------------------------------------------------------------------
# wrapper-side glue
# ----------------------------------------------------------------------------
def im2col_patches_T(x, p):
  """NCHW (B, Cin, H, W) -> transposed patch matrix (Cin*p*p, B*N).

  K rows ordered (ci, kh, kw) to match Conv2d weight.reshape(C, Cin*kh*kw);
  M columns ordered (b, h', w') to match conv.flatten(2).transpose(-1, -2)."""
  B, Cin, H, W = x.shape
  assert H % p == 0 and W % p == 0, "image size must be a multiple of patch size"
  x = x.reshape(B, Cin, H // p, p, W // p, p)
  x = x.transpose(1, 3, 5, 0, 2, 4)              # (Cin, p, p, B, H', W')
  return x.reshape(Cin * p * p, B * (H // p) * (W // p))


def _batches_per_step(B, N, K, C, budget_bytes=8 << 20):
  """Pick nb = images per grid step (lane tile tm = nb*N).

  Whole-batch-aligned tiles keep the pos broadcast a static per-tile concat and
  leave the weight / pos operands VMEM-resident across steps.  The budget is
  sized against v7x (64 MiB VMEM, ~32 MiB scoped default), counting the
  double-buffered bf16 X^T tile and f32 output tile per image."""
  per_b = 2 * (K * N * 2 + C * N * 4)
  nb = int(max(1, min(B, budget_bytes // max(per_b, 1))))
  while nb > 1 and (B % nb or (nb * N) % 128):
    nb -= 1
  if (nb * N) % 128 and nb != B:
    # Can't lane-align a partial tile (last block dim must be a multiple of 128
    # or the full extent); fall back to a single full-M step.
    nb = B
  return nb


# ----------------------------------------------------------------------------
# Pallas kernel: fused patch-matmul + (pos + bias) add, transposed layout
# ----------------------------------------------------------------------------
def _embed_kernel(xT_ref, w_ref, posbT_ref, o_ref, *, nb):
  # xT_ref:    (K, tm)  bf16 flattened patches (tm = nb * N columns, lane axis)
  # w_ref:     (C, K)   bf16 conv weight, flattened
  # posbT_ref: (C, N)   f32 position embedding + conv bias (transposed)
  # o_ref:     (C, tm)  f32 output tile (lane-dense, unmasked stores)
  y = jnp.dot(w_ref[...], xT_ref[...], preferred_element_type=jnp.float32)   # MXU
  posb = posbT_ref[...]
  if nb > 1:
    # Broadcast over the nb images in this tile; lane concat hides in MXU slack.
    posb = jnp.concatenate([posb] * nb, axis=-1)
  o_ref[...] = y + posb


def embeddings_forward(params, x, *, patch):
  """Equivalent of Embeddings.forward(x) (inference mode)."""
  if x is None:
    return None
  B, Cin, H, W = x.shape
  C = params['pe_w'].shape[0]                    # out_channels == in_channels
  N = (H // patch) * (W // patch)
  K = Cin * patch * patch
  M = B * N

  # bf16 for the two large MXU operands (f32 accumulation in-kernel).
  patchesT = im2col_patches_T(x, patch).astype(jnp.bfloat16)          # (K, M)
  w = params['pe_w'].reshape(C, K).astype(jnp.bfloat16)               # (C, K)
  # Fold the conv bias into the (small, batch-independent) position embedding.
  posbT = (params['pos'][0] + params['pe_b'][None, :]).T.astype(jnp.float32)  # (C, N)

  nb = _batches_per_step(B, N, K, C)
  tm = nb * N
  grid = (B // nb,)

  cost = pl.CostEstimate(
      flops=2 * M * K * C,
      transcendentals=0,
      bytes_accessed=M * K * 2 + K * C * 2 + C * N * 4 + M * C * 4)

  outT = pl.pallas_call(
      functools.partial(_embed_kernel, nb=nb),
      out_shape=jax.ShapeDtypeStruct((C, M), jnp.float32),
      grid=grid,
      in_specs=[
          pl.BlockSpec((K, tm), lambda i: (0, i)),   # X^T tile, pipelined over M
          pl.BlockSpec((C, K), lambda i: (0, 0)),    # weight, VMEM-resident
          pl.BlockSpec((C, N), lambda i: (0, 0)),    # pos+bias, VMEM-resident
      ],
      out_specs=pl.BlockSpec((C, tm), lambda i: (0, i)),
      compiler_params=pltpu.CompilerParams(
          dimension_semantics=("parallel",)),        # shards M-tiles across TCs (v7x)
      cost_estimate=cost,
  )(patchesT, w, posbT)

  # TODO(synk): Dropout(0.1) omitted (inference identity).
  # Undo the transposed compute layout: (C, M) -> (B, N, C).
  return outT.reshape(C, B, N).transpose(1, 2, 0)


# ----------------------------------------------------------------------------
# parameter init (shapes exactly as in the PyTorch module __init__)
# ----------------------------------------------------------------------------
def init_params(key, in_channels, patch, n_patches):
  k1, k2, k3 = jax.random.split(key, 3)
  f = lambda k, s, sc=0.1: (sc * jax.random.normal(k, s)).astype(jnp.float32)
  return {
      'pe_w': f(k1, (in_channels, in_channels, patch, patch)),  # Conv2d (O,I,kh,kw)
      'pe_b': f(k2, (in_channels,)),                            # Conv2d bias
      # nn.Parameter(torch.zeros(1, n_patches, in_channels)); random here so the
      # numerical check below is non-trivial.
      'pos': f(k3, (1, n_patches, in_channels), 0.02),
  }


# ----------------------------------------------------------------------------
# demo + correctness check vs. a real strided convolution
# ----------------------------------------------------------------------------
if __name__ == "__main__":
  B, CIN, IMG, PATCH = 2, 32, 16, 2
  N_PATCHES = (IMG // PATCH) * (IMG // PATCH)        # 64

  key = jax.random.PRNGKey(0)
  kp, kx = jax.random.split(key)
  params = init_params(kp, CIN, PATCH, N_PATCHES)
  x = (0.1 * jax.random.normal(kx, (B, CIN, IMG, IMG))).astype(jnp.float32)

  fwd = jax.jit(functools.partial(embeddings_forward, patch=PATCH))
  y = fwd(params, x)
  jax.block_until_ready(y)
  assert y.shape == (B, N_PATCHES, CIN)

  # Reference: strided Conv2d + flatten(2) + transpose + bias + pos (dropout =
  # identity).  Inputs are rounded through bf16 exactly like the kernel's MXU
  # operands, so the comparison only sees accumulation-order differences.
  xq = x.astype(jnp.bfloat16).astype(jnp.float32)
  wq = params['pe_w'].astype(jnp.bfloat16).astype(jnp.float32)
  ref = lax.conv_general_dilated(
      xq, wq, window_strides=(PATCH, PATCH), padding='VALID',
      dimension_numbers=('NCHW', 'OIHW', 'NCHW'),
      precision=lax.Precision.HIGHEST)
  ref = ref + params['pe_b'][None, :, None, None]
  ref = ref.reshape(B, CIN, -1).transpose(0, 2, 1) + params['pos']
  err = float(jnp.abs(y - ref).max())
  assert jnp.allclose(y, ref, atol=1e-3, rtol=1e-3), err

  print("KERNEL_OK")
</pallas_src>

<mosaic_0001>
module attributes {stable_mosaic.version = 11 : i64} {
  func.func @_embed_kernel(%arg0: i32, %arg1: memref<128x128xbf16, #tpu.memory_space<vmem>>, %arg2: memref<32x128xbf16, #tpu.memory_space<vmem>>, %arg3: memref<32x64xf32, #tpu.memory_space<vmem>>, %arg4: memref<32x128xf32, #tpu.memory_space<vmem>>) attributes {dimension_semantics = [#tpu.dimension_semantics<parallel>], iteration_bounds = array<i64: 1>, scalar_prefetch = 0 : i64, scratch_operands = 0 : i64, tpu.core_type = #tpu.core_type<tc>, window_params = [{transform_indices = @transform_0, window_bounds = array<i64: 128, 128>}, {pipeline_mode = #tpu.pipeline_mode<synchronous>, transform_indices = @transform_1, window_bounds = array<i64: 32, 128>}, {pipeline_mode = #tpu.pipeline_mode<synchronous>, transform_indices = @transform_2, window_bounds = array<i64: 32, 64>}, {transform_indices = @transform_3, window_bounds = array<i64: 32, 128>}]} {
    %c0 = arith.constant 0 : index
    %c0_0 = arith.constant 0 : index
    %0 = vector.load %arg2[%c0, %c0_0] : memref<32x128xbf16, #tpu.memory_space<vmem>>, vector<32x128xbf16>
    %c0_1 = arith.constant 0 : index
    %c0_2 = arith.constant 0 : index
    %1 = vector.load %arg1[%c0_1, %c0_2] : memref<128x128xbf16, #tpu.memory_space<vmem>>, vector<128x128xbf16>
    %cst = arith.constant dense<0.000000e+00> : vector<32x128xf32>
    %2 = tpu.matmul %0, %1, %cst {dimension_numbers = #tpu.dot_dimension_numbers<[1], [0], [0], [1], [0, 0, 1, 1], [], []>} : vector<32x128xbf16>, vector<128x128xbf16>, vector<32x128xf32> -> vector<32x128xf32>
    %c0_3 = arith.constant 0 : index
    %c0_4 = arith.constant 0 : index
    %3 = vector.load %arg3[%c0_3, %c0_4] : memref<32x64xf32, #tpu.memory_space<vmem>>, vector<32x64xf32>
    %4 = tpu.concatenate %3, %3 in 1 : vector<32x64xf32>, vector<32x64xf32> -> vector<32x128xf32>
    %5 = arith.addf %2, %4 : vector<32x128xf32>
    %c0_5 = arith.constant 0 : index
    %c0_6 = arith.constant 0 : index
    %6 = vector.load %arg4[%c0_5, %c0_6] : memref<32x128xf32, #tpu.memory_space<vmem>>, vector<32x128xf32>
    tpu.vector_store %arg4[%c0_5, %c0_6], %5 {strides = array<i32>} : memref<32x128xf32, #tpu.memory_space<vmem>>, vector<32x128xf32>,
    return
  }
  func.func @transform_0(%arg0: i32) -> (i32, i32) {
    %c0_i32 = arith.constant 0 : i32
    %c0_i32_0 = arith.constant 0 : i32
    return %c0_i32, %arg0 : i32, i32
  }
  func.func @transform_1(%arg0: i32) -> (i32, i32) {
    %c0_i32 = arith.constant 0 : i32
    %c0_i32_0 = arith.constant 0 : i32
    %c0_i32_1 = arith.constant 0 : i32
    return %c0_i32, %c0_i32_0 : i32, i32
  }
  func.func @transform_2(%arg0: i32) -> (i32, i32) {
    %c0_i32 = arith.constant 0 : i32
    %c0_i32_0 = arith.constant 0 : i32
    %c0_i32_1 = arith.constant 0 : i32
    return %c0_i32, %c0_i32_0 : i32, i32
  }
  func.func @transform_3(%arg0: i32) -> (i32, i32) {
    %c0_i32 = arith.constant 0 : i32
    %c0_i32_0 = arith.constant 0 : i32
    return %c0_i32, %arg0 : i32, i32
  }
}

</mosaic_0001>

<llo_original>
// kernel: embeddings_forward.1
$region0: #{embeddings_forward.1}
  #allocation0 [shape = 'u32[]', space=smem, size = 0x4, offset = 0x4, fixed_abs, tag = 'smem constant byte address 0x4 - core index']
  #allocation1 [shape = 'u32[144,128]{1,0:T(1,128)}', space=vmem, size = 0x12000, scoped, tag = 'internal scratch']
  %s0 = inlined_call_operand.vmem [shape: bf16[128,128], index: 0, kind: input, shape index: {}]
  %s1 = inlined_call_operand.vmem [shape: bf16[32,128], index: 1, kind: input, shape index: {}]
  %s2 = inlined_call_operand.vmem [shape: f32[32,64], index: 2, kind: input, shape index: {}]
  %s3 = inlined_call_operand.vmem [shape: f32[32,128], index: 3, kind: output, shape index: {}]
  %s4 = sld [smem:[#allocation0]]
  $region22: #{embeddings_forward.1} parent=0
    _
  %s6 = ssub.s32 1, %s4
  %s7 = scalar_select 0, %s6, %s4
  // Predicated region
  $region2: #{embeddings_forward.1} parent=0 // pred_check
    _
  $region3: #{embeddings_forward.1} parent=0 // pred_check_branch
    %9 = sbr.rel (0) target = $region5
  $region4: #{embeddings_forward.1} parent=0 // pred_region
    _
  $region5: #{embeddings_forward.1} parent=0 // pred_fallthru
    _
  // Predicated region
  $region6: #{embeddings_forward.1} parent=0 // pred_check
    _
  $region7: #{embeddings_forward.1} parent=0 // pred_check_branch
    %11 = sbr.rel (0) target = $region9
  $region8: #{embeddings_forward.1} parent=0 // pred_region
    _
  $region9: #{embeddings_forward.1} parent=0 // pred_fallthru
    _
  // Predicated region
  $region10: #{embeddings_forward.1} parent=0 // pred_check
    _
  $region11: #{embeddings_forward.1} parent=0 // pred_check_branch
    %13 = sbr.rel (0) target = $region13
  $region12: #{embeddings_forward.1} parent=0 // pred_region
    _
  $region13: #{embeddings_forward.1} parent=0 // pred_fallthru
    _
  %v15 = vld [vmem:[%s1] sm:$0xf]
  %v16 = vld [vmem:[%s1 + $0x4] sm:$0xf]
  %v17 = vld [vmem:[%s1 + $0x8] sm:$0xf]
  %v18 = vld [vmem:[%s1 + $0xc] sm:$0xf]
  %v19 = vld [vmem:[%s0] sm:$0xf]
  %v20 = vld [vmem:[%s0 + $0x4] sm:$0xf]
  %v21 = vld [vmem:[%s0 + $0x8] sm:$0xf]
  %v22 = vld [vmem:[%s0 + $0xc] sm:$0xf]
  %v23 = vld [vmem:[%s0 + $0x10] sm:$0xf]
  %v24 = vld [vmem:[%s0 + $0x14] sm:$0xf]
  %v25 = vld [vmem:[%s0 + $0x18] sm:$0xf]
  %v26 = vld [vmem:[%s0 + $0x1c] sm:$0xf]
  %v27 = vld [vmem:[%s0 + $0x20] sm:$0xf]
  %v28 = vld [vmem:[%s0 + $0x24] sm:$0xf]
  %v29 = vld [vmem:[%s0 + $0x28] sm:$0xf]
  %v30 = vld [vmem:[%s0 + $0x2c] sm:$0xf]
  %v31 = vld [vmem:[%s0 + $0x30] sm:$0xf]
  %v32 = vld [vmem:[%s0 + $0x34] sm:$0xf]
  %v33 = vld [vmem:[%s0 + $0x38] sm:$0xf]
  %v34 = vld [vmem:[%s0 + $0x3c] sm:$0xf]
  %v35 = vld [vmem:[%s2] sm:$0xff]
  %v36 = vld [vmem:[%s2 + $0x8] sm:$0xff]
  %v37 = vld [vmem:[%s2 + $0x10] sm:$0xff]
  %v38 = vld [vmem:[%s2 + $0x18] sm:$0xff]
  %43 = vrot.lane.b32.xlu0 %v35, 64
  %v44 = vpop.permute.xlu0 %43
  %45 = vrot.lane.b32.xlu0 %v36, 64
  %v46 = vpop.permute.xlu0 %45
  %47 = vrot.lane.b32.xlu0 %v37, 64
  %v48 = vpop.permute.xlu0 %47
  %49 = vrot.lane.b32.xlu0 %v38, 64
  %v50 = vpop.permute.xlu0 %49
  %vm55 = vcmask 523264
  %v56 = vsel %vm55, %v35, %v44
  %v57 = vsel %vm55, %v36, %v46
  %v58 = vsel %vm55, %v37, %v48
  %v59 = vsel %vm55, %v38, %v50
  %v64 = vunpack.c.l.b16 %v15
  %v65 = vunpack.c.l.b16 %v16
  %v66 = vunpack.c.l.b16 %v17
  %v67 = vunpack.c.l.b16 %v18
  %v68 = vpack.c.b16 %v65, %v64
  %v69 = vpack.c.b16 %v67, %v66
  %v88 = vunpack.c.l.b16 %v19
  %v89 = vunpack.c.l.b16 %v20
  %v90 = vunpack.c.l.b16 %v21
  %v91 = vunpack.c.l.b16 %v22
  %v92 = vunpack.c.l.b16 %v23
  %v93 = vunpack.c.l.b16 %v24
  %v94 = vunpack.c.l.b16 %v25
  %v95 = vunpack.c.l.b16 %v26
  %v96 = vunpack.c.l.b16 %v27
  %v97 = vunpack.c.l.b16 %v28
  %v98 = vunpack.c.l.b16 %v29
  %v99 = vunpack.c.l.b16 %v30
  %v100 = vunpack.c.l.b16 %v31
  %v101 = vunpack.c.l.b16 %v32
  %v102 = vunpack.c.l.b16 %v33
  %v103 = vunpack.c.l.b16 %v34
  %v104 = vpack.c.b16 %v89, %v88
  %v105 = vpack.c.b16 %v91, %v90
  %v106 = vpack.c.b16 %v93, %v92
  %v107 = vpack.c.b16 %v95, %v94
  %v108 = vpack.c.b16 %v97, %v96
  %v109 = vpack.c.b16 %v99, %v98
  %v110 = vpack.c.b16 %v101, %v100
  %v111 = vpack.c.b16 %v103, %v102
  %120 = vmatprep.subr.bf16.mxu0 0
  %121 = vmatpush1.bf16.msra.mxu0 %v104
  %122 = vmatprep.subr.bf16.mxu0 0
  %123 = vmatpush1.bf16.msra.mxu0 %v105
  %124 = vmatprep.subr.bf16.mxu0 0
  %125 = vmatpush1.bf16.msra.mxu0 %v106
  %126 = vmatprep.subr.bf16.mxu0 0
  %127 = vmatpush1.bf16.msra.mxu0 %v107
  %128 = vmatprep.subr.bf16.mxu0 0
  %129 = vmatpush1.bf16.msra.mxu0 %v108
  %130 = vmatprep.subr.bf16.mxu0 0
  %131 = vmatpush1.bf16.msra.mxu0 %v109
  %132 = vmatprep.subr.bf16.mxu0 0
  %133 = vmatpush1.bf16.msra.mxu0 %v110
  %134 = vmatprep.subr.bf16.mxu0 0
  %135 = vmatpush1.bf16.msra.mxu0 %v111
  %136 = vmatprep.subr.bf16.mxu0 0
  %137 = vmatpush1.bf16.msra.mxu0 0
  %138 = vmatprep.subr.bf16.mxu0 0
  %139 = vmatpush1.bf16.msra.mxu0 0
  %140 = vmatprep.subr.bf16.mxu0 0
  %141 = vmatpush1.bf16.msra.mxu0 0
  %142 = vmatprep.subr.bf16.mxu0 0
  %143 = vmatpush1.bf16.msra.mxu0 0
  %144 = vmatprep.subr.bf16.mxu0 0
  %145 = vmatpush1.bf16.msra.mxu0 0
  %146 = vmatprep.subr.bf16.mxu0 0
  %147 = vmatpush1.bf16.msra.mxu0 0
  %148 = vmatprep.subr.bf16.mxu0 0
  %149 = vmatpush1.bf16.msra.mxu0 0
  %150 = vmatprep.subr.bf16.mxu0 0
  %151 = vmatpush1.bf16.msra.mxu0 0
  %152 = vmatprep.mubr.bf16.mxu0 0
  %153 = vmatmul.mubr.bf16.gmra.mrb[0].mxu0 %v68
  %v154 = vpop.f32.mrb[0].mxu0
  %v155 = vadd.f32 %v56, %v154
  %v156 = vpop.f32.mrb[0].mxu0
  %v157 = vpop.f32.mrb[0].mxu0
  %v158 = vadd.f32 %v57, %v157
  %v159 = vpop.f32.mrb[0].mxu0
  %160 = vmatprep.mubr.bf16.mxu0 0
  %161 = vmatmul.mubr.bf16.gmra.mrb[0].mxu0 %v69
  %v162 = vpop.f32.mrb[0].mxu0
  %v163 = vadd.f32 %v58, %v162
  %v164 = vpop.f32.mrb[0].mxu0
  %v165 = vpop.f32.mrb[0].mxu0
  %v166 = vadd.f32 %v59, %v165
  %v167 = vpop.f32.mrb[0].mxu0
  %168 = vdwg.mxu0
  %169 = vst [vmem:[%s3] sm:$0xff] %v155
  %170 = vst [vmem:[%s3 + $0x8] sm:$0xff] %v158
  %171 = vst [vmem:[%s3 + $0x10] sm:$0xff] %v163
  %172 = vst [vmem:[%s3 + $0x18] sm:$0xff] %v166
  // Predicated region
  $region14: #{embeddings_forward.1} parent=0 // pred_check
    _
  $region15: #{embeddings_forward.1} parent=0 // pred_check_branch
    %174 = sbr.rel (0) target = $region17
  $region16: #{embeddings_forward.1} parent=0 // pred_region
    _
  $region17: #{embeddings_forward.1} parent=0 // pred_fallthru
    _
  // Predicated region
  $region18: #{embeddings_forward.1} parent=0 // pred_check
    _
  $region19: #{embeddings_forward.1} parent=0 // pred_check_branch
    %176 = sbr.rel (0) target = $region21
  $region20: #{embeddings_forward.1} parent=0 // pred_region
    _
  $region21: #{embeddings_forward.1} parent=0 // pred_fallthru
    _

</llo_original>
